<compile_context>
chip_gen: v7x
topology: tpu7x:2x2x1
jax: 0.10.0
libtpu: 0.0.40
codegen_flags: <defaults>
</compile_context>

<pallas_src>
import functools

import jax
import jax.numpy as jnp
import numpy as np
from jax.experimental import pallas as pl
from jax.experimental.pallas import tpu as pltpu


def _reweight(option, iou):
    if option == "none":
        return jnp.ones_like(iou)
    elif option == "linear":
        return iou
    elif option == "exp":
        return jnp.exp(iou) - 1.0
    raise ValueError(option)


def _supcon_kernel(feat_r_ref, feat_c_ref, lab_r_ref, lab_c_ref, den_ref,
                   per_ref, m_sc, z_sc, s_sc, *, block_m, block_n):
    i = pl.program_id(0)          # row-block index ("parallel")
    j = pl.program_id(1)          # column-block index ("arbitrary" reduction)

    @pl.when(j == 0)
    def _():
        m_sc[...] = jnp.full((block_m, 1), -jnp.inf, jnp.float32)
        z_sc[...] = jnp.zeros_like(z_sc)
        s_sc[...] = jnp.zeros_like(s_sc)

    # Features were pre-scaled by 1/sqrt(T) in the wrapper, so this already
    # yields F @ F^T / T without any per-tile VALU pass.
    sim = jax.lax.dot_general(feat_r_ref[...], feat_c_ref[...],
                              (((1,), (1,)), ((), ())),
                              preferred_element_type=jnp.float32)  # [TM, TN]

    lab_r = lab_r_ref[...]                       # [TM, 1] int32
    lab_c = lab_c_ref[...]                       # [1, TN] int32 (lane-major)
    same_label = lab_r == lab_c                  # [TM, TN] bool (no transpose)

    # Online log-sum-exp state (max includes the diagonal, exactly like the
    # reference's detached rowmax; it cancels in the algebra below).
    tile_max = jnp.max(sim, axis=1, keepdims=True)
    m_new = jnp.maximum(m_sc[...], tile_max)
    alpha = jnp.exp(m_sc[...] - m_new)
    m_sc[...] = m_new

    row0 = i * block_m
    col0 = j * block_n
    has_diag = jnp.logical_and(row0 < col0 + block_n, col0 < row0 + block_m)

    @pl.when(has_diag)
    def _():
        row_g = row0 + jax.lax.broadcasted_iota(jnp.int32, (block_m, block_n), 0)
        col_g = col0 + jax.lax.broadcasted_iota(jnp.int32, (block_m, block_n), 1)
        off_diag = row_g != col_g
        p = jnp.where(off_diag, jnp.exp(sim - m_new), 0.0)
        z_sc[...] = alpha * z_sc[...] + jnp.sum(p, axis=1, keepdims=True)
        combined = jnp.logical_and(same_label, off_diag)
        s_sc[...] = s_sc[...] + jnp.sum(jnp.where(combined, sim, 0.0),
                                        axis=1, keepdims=True)

    @pl.when(jnp.logical_not(has_diag))
    def _():
        # No diagonal element in this tile: skip iota / compare / masking.
        p = jnp.exp(sim - m_new)
        z_sc[...] = alpha * z_sc[...] + jnp.sum(p, axis=1, keepdims=True)
        s_sc[...] = s_sc[...] + jnp.sum(jnp.where(same_label, sim, 0.0),
                                        axis=1, keepdims=True)

    @pl.when(j == pl.num_programs(1) - 1)
    def _():
        den = den_ref[...]                 # same-label count incl. self (wrapper)
        cnt = den - 1.0                    # off-diagonal same-label count
        log_z = m_sc[...] + jnp.log(z_sc[...])   # log sum_j exp(sim)*logits_mask
        per_ref[...] = (s_sc[...] - log_z * cnt) / den


def _row_tile(M, target):
    """Largest multiple-of-8 divisor of M that is <= target (falls back to M)."""
    b = min(target, M)
    b -= b % 8
    while b >= 8:
        if M % b == 0:
            return b
        b -= 8
    return M


def _col_tile(M, target):
    """Largest multiple-of-128 divisor of M <= target; else full M.

    (1, block_n) label tiles put block_n on the lane axis, so it must be a
    multiple of 128 or span the whole array."""
    b = min(target, M)
    b -= b % 128
    while b >= 128:
        if M % b == 0:
            return b
        b -= 128
    return M


def supcon_loss(features, labels, ious, *,
                temperature=0.2, iou_threshold=0.5, reweight_func="none",
                block_m=None, block_n=None):
    """features: [M, K] f32; labels: [M] int; ious: [M] f32 -> scalar f32."""
    M, K = features.shape

    # Fold 1/temperature into the features once (both matmul operands are the
    # same array, so the product picks up exactly 1/T).
    feats = features.astype(jnp.float32) * np.float32(1.0 / np.sqrt(temperature))

    # Lane-dense feature dim: pad K to a multiple of 128 (zero columns don't
    # change F @ F^T).
    k_pad = ((K + 127) // 128) * 128
    if k_pad != K:
        feats = jnp.pad(feats, ((0, 0), (0, k_pad - K)))

    # Tiling: >=2 row blocks when possible (v7x megacore shards the "parallel"
    # axis), column tiles a multiple of 128 (lane-legal label blocks).  Live
    # VMEM is dominated by a handful of [TM,TN] f32 temporaries -> well under
    # the 32 MiB scoped / 64 MiB v7x budget at these sizes.
    if block_m is None:
        block_m = _row_tile(M, max(8, min(512, max(8, M // 2))))
    if block_n is None:
        block_n = _col_tile(M, 256)
    assert M % block_m == 0 and M % block_n == 0, "M must divide the tile sizes"
    assert block_m == M or block_m % 8 == 0
    assert block_n == M or block_n % 128 == 0

    grid = (M // block_m, M // block_n)

    labels = labels.astype(jnp.int32)
    lab_rows = labels.reshape(M, 1)
    lab_cols = labels.reshape(1, M)
    # Per-row same-label counts precomputed once (removes 2 XLU reductions,
    # 2 bool->f32 casts and 2 accumulators from every tile).  O(M^2) bools here
    # are negligible next to the O(M^2 K) matmul; a bincount-gather works too.
    den = jnp.sum((lab_rows == lab_cols).astype(jnp.float32),
                  axis=1, keepdims=True)

    kernel = functools.partial(_supcon_kernel, block_m=block_m, block_n=block_n)

    per_rows = pl.pallas_call(
        kernel,
        out_shape=jax.ShapeDtypeStruct((M, 1), jnp.float32),
        grid=grid,
        in_specs=[
            pl.BlockSpec((block_m, k_pad), lambda i, j: (i, 0)),  # feature rows
            pl.BlockSpec((block_n, k_pad), lambda i, j: (j, 0)),  # feature cols
            pl.BlockSpec((block_m, 1), lambda i, j: (i, 0)),      # labels (rows)
            pl.BlockSpec((1, block_n), lambda i, j: (0, j)),      # labels (cols)
            pl.BlockSpec((block_m, 1), lambda i, j: (i, 0)),      # same-label den
        ],
        out_specs=pl.BlockSpec((block_m, 1), lambda i, j: (i, 0)),
        scratch_shapes=[pltpu.VMEM((block_m, 1), jnp.float32)] * 3,  # m, z, s
        compiler_params=pltpu.CompilerParams(
            dimension_semantics=("parallel", "arbitrary")),
    )(feats, feats, lab_rows, lab_cols, den)

    # O(M) epilogue in plain JAX (matches reference; NaN if nothing kept,
    # identical to the PyTorch module).
    keep = (ious >= iou_threshold).astype(jnp.float32)
    coef = _reweight(reweight_func, ious)
    loss_rows = -per_rows[:, 0] * coef
    return jnp.sum(loss_rows * keep) / jnp.sum(keep)


def supcon_loss_ref(features, labels, ious, *,
                    temperature=0.2, iou_threshold=0.5, reweight_func="none"):
    """Pure-JAX reference mirroring the PyTorch forward (effective path)."""
    M = features.shape[0]
    labels = labels.reshape(-1, 1)
    label_mask = (labels == labels.T).astype(jnp.float32)
    sim = (features @ features.T) / temperature
    sim = sim - jnp.max(sim, axis=1, keepdims=True)
    logits_mask = 1.0 - jnp.eye(M, dtype=jnp.float32)
    exp_sim = jnp.exp(sim) * logits_mask
    log_prob = sim - jnp.log(exp_sim.sum(axis=1, keepdims=True))
    per = (log_prob * logits_mask * label_mask).sum(1) / label_mask.sum(1)
    keep = ious >= iou_threshold
    coef = _reweight(reweight_func, ious)
    loss = -per * coef
    return jnp.sum(jnp.where(keep, loss, 0.0)) / jnp.sum(keep.astype(jnp.float32))


if __name__ == "__main__":
    M, K = 256, 96         # M proposals, K-dim (normalized) contrastive features
    key = jax.random.PRNGKey(0)
    kf, kl, ki = jax.random.split(key, 3)

    feats = jax.random.normal(kf, (M, K), dtype=jnp.float32)
    feats = feats / jnp.linalg.norm(feats, axis=1, keepdims=True)   # cosine-sim features
    labels = jax.random.randint(kl, (M,), 0, 5, dtype=jnp.int32)
    ious = jax.random.uniform(ki, (M,), dtype=jnp.float32)

    ref = jax.block_until_ready(supcon_loss_ref(feats, labels, ious))

    # Tiled / column-streamed path: grid = (4, 2) exercises the online LSE and
    # both diagonal-gated branches (block_m != block_n).
    out_tiled = jax.block_until_ready(
        supcon_loss(feats, labels, ious, block_m=64, block_n=128))
    assert np.allclose(np.asarray(out_tiled), np.asarray(ref),
                       rtol=1e-4, atol=1e-4), (out_tiled, ref)

    # Default tiling: block_m=128 (2 row blocks for megacore), block_n=256.
    out_default = jax.block_until_ready(supcon_loss(feats, labels, ious))
    assert np.allclose(np.asarray(out_default), np.asarray(ref),
                       rtol=1e-4, atol=1e-4), (out_default, ref)

    print("KERNEL_OK")
</pallas_src>

<mosaic_0001>
module attributes {stable_mosaic.version = 11 : i64} {
  func.func @_supcon_kernel(%arg0: i32, %arg1: i32, %arg2: memref<64x128xf32, #tpu.memory_space<vmem>>, %arg3: memref<128x128xf32, #tpu.memory_space<vmem>>, %arg4: memref<64x1xi32, #tpu.memory_space<vmem>>, %arg5: memref<1x128xi32, #tpu.memory_space<vmem>>, %arg6: memref<64x1xf32, #tpu.memory_space<vmem>>, %arg7: memref<64x1xf32, #tpu.memory_space<vmem>>, %arg8: memref<64x1xf32, #tpu.memory_space<vmem>>, %arg9: memref<64x1xf32, #tpu.memory_space<vmem>>, %arg10: memref<64x1xf32, #tpu.memory_space<vmem>>) attributes {dimension_semantics = [#tpu.dimension_semantics<parallel>, #tpu.dimension_semantics<arbitrary>], iteration_bounds = array<i64: 4, 2>, scalar_prefetch = 0 : i64, scratch_operands = 3 : i64, tpu.core_type = #tpu.core_type<tc>, window_params = [{transform_indices = @transform_0, window_bounds = array<i64: 64, 128>}, {transform_indices = @transform_1, window_bounds = array<i64: 128, 128>}, {transform_indices = @transform_2, window_bounds = array<i64: 64, 1>}, {transform_indices = @transform_3, window_bounds = array<i64: 1, 128>}, {transform_indices = @transform_4, window_bounds = array<i64: 64, 1>}, {transform_indices = @transform_5, window_bounds = array<i64: 64, 1>}]} {
    %c0_i32 = arith.constant 0 : i32
    %0 = arith.cmpi eq, %arg1, %c0_i32 : i32
    %1 = arith.extui %0 : i1 to i32
    %c0_i32_0 = arith.constant 0 : i32
    %2 = arith.cmpi ne, %1, %c0_i32_0 : i32
    scf.if %2 {
      %cst_20 = arith.constant 0xFF800000 : f32
      %34 = vector.broadcast %cst_20 : f32 to vector<64x1xf32>
      %c0_21 = arith.constant 0 : index
      %c0_22 = arith.constant 0 : index
      %35 = vector.load %arg8[%c0_21, %c0_22] : memref<64x1xf32, #tpu.memory_space<vmem>>, vector<64x1xf32>
      tpu.vector_store %arg8[%c0_21, %c0_22], %34 {strides = array<i32>} : memref<64x1xf32, #tpu.memory_space<vmem>>, vector<64x1xf32>,
      %cst_23 = arith.constant 0.000000e+00 : f32
      %36 = vector.broadcast %cst_23 : f32 to vector<64x1xf32>
      %c0_24 = arith.constant 0 : index
      %c0_25 = arith.constant 0 : index
      %37 = vector.load %arg9[%c0_24, %c0_25] : memref<64x1xf32, #tpu.memory_space<vmem>>, vector<64x1xf32>
      tpu.vector_store %arg9[%c0_24, %c0_25], %36 {strides = array<i32>} : memref<64x1xf32, #tpu.memory_space<vmem>>, vector<64x1xf32>,
      %cst_26 = arith.constant 0.000000e+00 : f32
      %38 = vector.broadcast %cst_26 : f32 to vector<64x1xf32>
      %c0_27 = arith.constant 0 : index
      %c0_28 = arith.constant 0 : index
      %39 = vector.load %arg10[%c0_27, %c0_28] : memref<64x1xf32, #tpu.memory_space<vmem>>, vector<64x1xf32>
      tpu.vector_store %arg10[%c0_27, %c0_28], %38 {strides = array<i32>} : memref<64x1xf32, #tpu.memory_space<vmem>>, vector<64x1xf32>,
    } else {
    }
    %c0 = arith.constant 0 : index
    %c0_1 = arith.constant 0 : index
    %3 = vector.load %arg2[%c0, %c0_1] : memref<64x128xf32, #tpu.memory_space<vmem>>, vector<64x128xf32>
    %c0_2 = arith.constant 0 : index
    %c0_3 = arith.constant 0 : index
    %4 = vector.load %arg3[%c0_2, %c0_3] : memref<128x128xf32, #tpu.memory_space<vmem>>, vector<128x128xf32>
    %cst = arith.constant dense<0.000000e+00> : vector<64x128xf32>
    %5 = tpu.matmul %3, %4, %cst {dimension_numbers = #tpu.dot_dimension_numbers<[1], [1], [0], [0], [0, 0, 1, 0], [], []>} : vector<64x128xf32>, vector<128x128xf32>, vector<64x128xf32> -> vector<64x128xf32>
    %c0_4 = arith.constant 0 : index
    %c0_5 = arith.constant 0 : index
    %6 = vector.load %arg4[%c0_4, %c0_5] : memref<64x1xi32, #tpu.memory_space<vmem>>, vector<64x1xi32>
    %c0_6 = arith.constant 0 : index
    %c0_7 = arith.constant 0 : index
    %7 = vector.load %arg5[%c0_6, %c0_7] : memref<1x128xi32, #tpu.memory_space<vmem>>, vector<1x128xi32>
    %8 = vector.broadcast %6 : vector<64x1xi32> to vector<64x128xi32>
    %9 = vector.broadcast %7 : vector<1x128xi32> to vector<64x128xi32>
    %10 = arith.cmpi eq, %8, %9 : vector<64x128xi32>
    %cst_8 = arith.constant dense<0xFF800000> : vector<64xf32>
    %11 = vector.multi_reduction <maximumf>, %5, %cst_8 [1] : vector<64x128xf32> to vector<64xf32>
    %12 = vector.shape_cast %11 : vector<64xf32> to vector<64x1xf32>
    %c0_9 = arith.constant 0 : index
    %c0_10 = arith.constant 0 : index
    %13 = vector.load %arg8[%c0_9, %c0_10] : memref<64x1xf32, #tpu.memory_space<vmem>>, vector<64x1xf32>
    %14 = arith.maximumf %13, %12 : vector<64x1xf32>
    %c0_11 = arith.constant 0 : index
    %c0_12 = arith.constant 0 : index
    %15 = vector.load %arg8[%c0_11, %c0_12] : memref<64x1xf32, #tpu.memory_space<vmem>>, vector<64x1xf32>
    %16 = arith.subf %15, %14 : vector<64x1xf32>
    %17 = math.exp %16 : vector<64x1xf32>
    %c0_13 = arith.constant 0 : index
    %c0_14 = arith.constant 0 : index
    %18 = vector.load %arg8[%c0_13, %c0_14] : memref<64x1xf32, #tpu.memory_space<vmem>>, vector<64x1xf32>
    tpu.vector_store %arg8[%c0_13, %c0_14], %14 {strides = array<i32>} : memref<64x1xf32, #tpu.memory_space<vmem>>, vector<64x1xf32>,
    %c64_i32 = arith.constant 64 : i32
    %19 = arith.muli %arg0, %c64_i32 : i32
    %c128_i32 = arith.constant 128 : i32
    %20 = arith.muli %arg1, %c128_i32 : i32
    %c128_i32_15 = arith.constant 128 : i32
    %21 = arith.addi %20, %c128_i32_15 : i32
    %22 = arith.cmpi slt, %19, %21 : i32
    %c64_i32_16 = arith.constant 64 : i32
    %23 = arith.addi %19, %c64_i32_16 : i32
    %24 = arith.cmpi slt, %20, %23 : i32
    %25 = arith.andi %22, %24 : i1
    %26 = arith.extui %25 : i1 to i32
    %c0_i32_17 = arith.constant 0 : i32
    %27 = arith.cmpi ne, %26, %c0_i32_17 : i32
    scf.if %27 {
      %34 = tpu.iota {dimensions = array<i32: 0>} : vector<64x128xi32>
      %35 = vector.broadcast %19 : i32 to vector<64x128xi32>
      %36 = arith.addi %35, %34 : vector<64x128xi32>
      %37 = tpu.iota {dimensions = array<i32: 1>} : vector<64x128xi32>
      %38 = vector.broadcast %20 : i32 to vector<64x128xi32>
      %39 = arith.addi %38, %37 : vector<64x128xi32>
      %40 = arith.cmpi ne, %36, %39 : vector<64x128xi32>
      %41 = vector.broadcast %14 : vector<64x1xf32> to vector<64x128xf32>
      %42 = arith.subf %5, %41 : vector<64x128xf32>
      %43 = math.exp %42 : vector<64x128xf32>
      %cst_20 = arith.constant 0.000000e+00 : f32
      %44 = vector.broadcast %cst_20 : f32 to vector<64x128xf32>
      %45 = arith.select %40, %43, %44 : vector<64x128xi1>, vector<64x128xf32>
      %c0_21 = arith.constant 0 : index
      %c0_22 = arith.constant 0 : index
      %46 = vector.load %arg9[%c0_21, %c0_22] : memref<64x1xf32, #tpu.memory_space<vmem>>, vector<64x1xf32>
      %47 = arith.mulf %17, %46 : vector<64x1xf32>
      %cst_23 = arith.constant dense<0.000000e+00> : vector<64xf32>
      %48 = vector.multi_reduction <add>, %45, %cst_23 [1] : vector<64x128xf32> to vector<64xf32>
      %49 = vector.shape_cast %48 : vector<64xf32> to vector<64x1xf32>
      %50 = arith.addf %47, %49 : vector<64x1xf32>
      %c0_24 = arith.constant 0 : index
      %c0_25 = arith.constant 0 : index
      %51 = vector.load %arg9[%c0_24, %c0_25] : memref<64x1xf32, #tpu.memory_space<vmem>>, vector<64x1xf32>
      tpu.vector_store %arg9[%c0_24, %c0_25], %50 {strides = array<i32>} : memref<64x1xf32, #tpu.memory_space<vmem>>, vector<64x1xf32>,
      %52 = arith.andi %10, %40 : vector<64x128xi1>
      %c0_26 = arith.constant 0 : index
      %c0_27 = arith.constant 0 : index
      %53 = vector.load %arg10[%c0_26, %c0_27] : memref<64x1xf32, #tpu.memory_space<vmem>>, vector<64x1xf32>
      %cst_28 = arith.constant 0.000000e+00 : f32
      %54 = vector.broadcast %cst_28 : f32 to vector<64x128xf32>
      %55 = arith.select %52, %5, %54 : vector<64x128xi1>, vector<64x128xf32>
      %cst_29 = arith.constant dense<0.000000e+00> : vector<64xf32>
      %56 = vector.multi_reduction <add>, %55, %cst_29 [1] : vector<64x128xf32> to vector<64xf32>
      %57 = vector.shape_cast %56 : vector<64xf32> to vector<64x1xf32>
      %58 = arith.addf %53, %57 : vector<64x1xf32>
      %c0_30 = arith.constant 0 : index
      %c0_31 = arith.constant 0 : index
      %59 = vector.load %arg10[%c0_30, %c0_31] : memref<64x1xf32, #tpu.memory_space<vmem>>, vector<64x1xf32>
      tpu.vector_store %arg10[%c0_30, %c0_31], %58 {strides = array<i32>} : memref<64x1xf32, #tpu.memory_space<vmem>>, vector<64x1xf32>,
    } else {
    }
    %true = arith.constant true
    %28 = arith.xori %25, %true : i1
    %29 = arith.extui %28 : i1 to i32
    %c0_i32_18 = arith.constant 0 : i32
    %30 = arith.cmpi ne, %29, %c0_i32_18 : i32
    scf.if %30 {
      %34 = vector.broadcast %14 : vector<64x1xf32> to vector<64x128xf32>
      %35 = arith.subf %5, %34 : vector<64x128xf32>
      %36 = math.exp %35 : vector<64x128xf32>
      %c0_20 = arith.constant 0 : index
      %c0_21 = arith.constant 0 : index
      %37 = vector.load %arg9[%c0_20, %c0_21] : memref<64x1xf32, #tpu.memory_space<vmem>>, vector<64x1xf32>
      %38 = arith.mulf %17, %37 : vector<64x1xf32>
      %cst_22 = arith.constant dense<0.000000e+00> : vector<64xf32>
      %39 = vector.multi_reduction <add>, %36, %cst_22 [1] : vector<64x128xf32> to vector<64xf32>
      %40 = vector.shape_cast %39 : vector<64xf32> to vector<64x1xf32>
      %41 = arith.addf %38, %40 : vector<64x1xf32>
      %c0_23 = arith.constant 0 : index
      %c0_24 = arith.constant 0 : index
      %42 = vector.load %arg9[%c0_23, %c0_24] : memref<64x1xf32, #tpu.memory_space<vmem>>, vector<64x1xf32>
      tpu.vector_store %arg9[%c0_23, %c0_24], %41 {strides = array<i32>} : memref<64x1xf32, #tpu.memory_space<vmem>>, vector<64x1xf32>,
      %c0_25 = arith.constant 0 : index
      %c0_26 = arith.constant 0 : index
      %43 = vector.load %arg10[%c0_25, %c0_26] : memref<64x1xf32, #tpu.memory_space<vmem>>, vector<64x1xf32>
      %cst_27 = arith.constant 0.000000e+00 : f32
      %44 = vector.broadcast %cst_27 : f32 to vector<64x128xf32>
      %45 = arith.select %10, %5, %44 : vector<64x128xi1>, vector<64x128xf32>
      %cst_28 = arith.constant dense<0.000000e+00> : vector<64xf32>
      %46 = vector.multi_reduction <add>, %45, %cst_28 [1] : vector<64x128xf32> to vector<64xf32>
      %47 = vector.shape_cast %46 : vector<64xf32> to vector<64x1xf32>
      %48 = arith.addf %43, %47 : vector<64x1xf32>
      %c0_29 = arith.constant 0 : index
      %c0_30 = arith.constant 0 : index
      %49 = vector.load %arg10[%c0_29, %c0_30] : memref<64x1xf32, #tpu.memory_space<vmem>>, vector<64x1xf32>
      tpu.vector_store %arg10[%c0_29, %c0_30], %48 {strides = array<i32>} : memref<64x1xf32, #tpu.memory_space<vmem>>, vector<64x1xf32>,
    } else {
    }
    %c1_i32 = arith.constant 1 : i32
    %31 = arith.cmpi eq, %arg1, %c1_i32 : i32
    %32 = arith.extui %31 : i1 to i32
    %c0_i32_19 = arith.constant 0 : i32
    %33 = arith.cmpi ne, %32, %c0_i32_19 : i32
    scf.if %33 {
      %c0_20 = arith.constant 0 : index
      %c0_21 = arith.constant 0 : index
      %34 = vector.load %arg6[%c0_20, %c0_21] : memref<64x1xf32, #tpu.memory_space<vmem>>, vector<64x1xf32>
      %cst_22 = arith.constant 1.000000e+00 : f32
      %35 = vector.broadcast %cst_22 : f32 to vector<64x1xf32>
      %36 = arith.subf %34, %35 : vector<64x1xf32>
      %c0_23 = arith.constant 0 : index
      %c0_24 = arith.constant 0 : index
      %37 = vector.load %arg8[%c0_23, %c0_24] : memref<64x1xf32, #tpu.memory_space<vmem>>, vector<64x1xf32>
      %c0_25 = arith.constant 0 : index
      %c0_26 = arith.constant 0 : index
      %38 = vector.load %arg9[%c0_25, %c0_26] : memref<64x1xf32, #tpu.memory_space<vmem>>, vector<64x1xf32>
      %39 = math.log %38 : vector<64x1xf32>
      %40 = arith.addf %37, %39 : vector<64x1xf32>
      %c0_27 = arith.constant 0 : index
      %c0_28 = arith.constant 0 : index
      %41 = vector.load %arg10[%c0_27, %c0_28] : memref<64x1xf32, #tpu.memory_space<vmem>>, vector<64x1xf32>
      %42 = arith.mulf %40, %36 : vector<64x1xf32>
      %43 = arith.subf %41, %42 : vector<64x1xf32>
      %44 = arith.divf %43, %34 : vector<64x1xf32>
      %c0_29 = arith.constant 0 : index
      %c0_30 = arith.constant 0 : index
      %45 = vector.load %arg7[%c0_29, %c0_30] : memref<64x1xf32, #tpu.memory_space<vmem>>, vector<64x1xf32>
      tpu.vector_store %arg7[%c0_29, %c0_30], %44 {strides = array<i32>} : memref<64x1xf32, #tpu.memory_space<vmem>>, vector<64x1xf32>,
    } else {
    }
    return
  }
  func.func @transform_0(%arg0: i32, %arg1: i32) -> (i32, i32) {
    %c0_i32 = arith.constant 0 : i32
    %c0_i32_0 = arith.constant 0 : i32
    return %arg0, %c0_i32 : i32, i32
  }
  func.func @transform_1(%arg0: i32, %arg1: i32) -> (i32, i32) {
    %c0_i32 = arith.constant 0 : i32
    %c0_i32_0 = arith.constant 0 : i32
    return %arg1, %c0_i32 : i32, i32
  }
  func.func @transform_2(%arg0: i32, %arg1: i32) -> (i32, i32) {
    %c0_i32 = arith.constant 0 : i32
    %c0_i32_0 = arith.constant 0 : i32
    return %arg0, %c0_i32 : i32, i32
  }
  func.func @transform_3(%arg0: i32, %arg1: i32) -> (i32, i32) {
    %c0_i32 = arith.constant 0 : i32
    %c0_i32_0 = arith.constant 0 : i32
    return %c0_i32, %arg1 : i32, i32
  }
  func.func @transform_4(%arg0: i32, %arg1: i32) -> (i32, i32) {
    %c0_i32 = arith.constant 0 : i32
    %c0_i32_0 = arith.constant 0 : i32
    return %arg0, %c0_i32 : i32, i32
  }
  func.func @transform_5(%arg0: i32, %arg1: i32) -> (i32, i32) {
    %c0_i32 = arith.constant 0 : i32
    %c0_i32_0 = arith.constant 0 : i32
    return %arg0, %c0_i32 : i32, i32
  }
}

</mosaic_0001>

<llo_original>
// kernel: tpu_custom_call.1
$region0: #{tpu_custom_call.1}
  #allocation0 [shape = 'u32[]', space=smem, size = 0x4, offset = 0x4, fixed_abs, tag = 'smem constant byte address 0x4 - core index']
  #allocation1 [shape = 'u32[144,128]{1,0:T(1,128)}', space=vmem, size = 0x12000, scoped, tag = 'internal scratch']
  #allocation2 [shape = 'f32[64,1]{1,0:T(8,128)}', space=vmem, size = 0x8000, scoped, tag = 'scratch operand']
  #allocation3 [shape = 'f32[64,1]{1,0:T(8,128)}', space=vmem, size = 0x8000, scoped, tag = 'scratch operand']
  #allocation4 [shape = 'f32[64,1]{1,0:T(8,128)}', space=vmem, size = 0x8000, scoped, tag = 'scratch operand']
  %s0 = inlined_call_operand.vmem [shape: f32[256,128], index: 0, kind: input, shape index: {}]
  %s1 = inlined_call_operand.vmem [shape: f32[256,128], index: 1, kind: input, shape index: {}]
  %s2 = inlined_call_operand.vmem [shape: s32[256,1], index: 2, kind: input, shape index: {}]
  %s3 = inlined_call_operand.vmem [shape: s32[1,256], index: 3, kind: input, shape index: {}]
  %s4 = inlined_call_operand.vmem [shape: f32[256,1], index: 4, kind: input, shape index: {}]
  %s5 = inlined_call_operand.vmem [shape: f32[256,1], index: 5, kind: output, shape index: {}]
  %s6 = sld [smem:[#allocation0]]
  $region69: #{tpu_custom_call.1} parent=0
    _
  %s8 = ssub.s32 1, %s6
  %s9 = scalar_select 0, %s8, %s6
  loop: start=0, step=1, limit=10
  $region2: #{tpu_custom_call.1} parent=0 // loop_pre_header
    _
  $region3: #{tpu_custom_call.1} parent=0 // loop_header
    %s11 = sphi 0, %s15
    %p12 = scmp.ge.s32.totalorder %s11, 10
    %s18 = sphi 0, %s30
    %s19 = sphi 0, %s26
    %s20 = sphi 0, %s18
    %s21 = sphi 0, %s19
    %s22 = sphi 0, %s20
    %s23 = sphi 0, %s21
    %s33 = sphi 0, %s35
    %s36 = sphi 0, %s33
    %s37 = sphi 0, %s36
    %s53 = sphi 0, %s37
    %s59 = sphi 0, %s61
    %s62 = sphi 0, %s59
    %s63 = sphi 0, %s62
    %s79 = sphi 0, %s63
    %s85 = sphi 0, %s87
    %s88 = sphi 0, %s85
    %s89 = sphi 0, %s88
    %s105 = sphi 0, %s89
    %s111 = sphi 0, %s113
    %s114 = sphi 0, %s111
    %s115 = sphi 0, %s114
    %s131 = sphi 0, %s115
    %s137 = sphi 0, %s139
    %s140 = sphi 0, %s137
    %s141 = sphi 0, %s140
    %s157 = sphi 0, %s141
    %s163 = sphi 0, %s165
    %s166 = sphi 0, %s163
    %s167 = sphi 0, %s166
    %s183 = sphi 0, %s167
  $region4: #{tpu_custom_call.1} parent=0 // loop_header_branch
    %14 = sbr.rel (%p12) target = $region8
  $region5: #{tpu_custom_call.1} parent=0 // loop_body
    %s16 = ssub.s32 %s11, 1
    %s17 = ssub.s32 %s11, 2
    %s24 = sadd.s32 1, %s19
    %p25 = scmp.ge.s32.totalorder %s24, 2
    %s26 = scalar_select %p25, 0, %s24
    %s27 = sadd.s32 1, %s18
    %s28 = scalar_select %p25, %s27, %s18
    %p29 = scmp.ge.s32.totalorder %s28, 4
    %s30 = scalar_select %p29, 0, %s28
    %s31 = ssub.s32 %s18, %s30
    %p32 = scmp.eq.s32.totalorder %s31, 0
    %s34 = sadd.s32 %s33, 1
    %s35 = scalar_select %p32, %s33, %s34
    %p38 = pneg %p32
    %p39 = scmp.eq.s32.totalorder %s11, 7
    %p40 = por %p38, %p39
    %p41 = scmp.ne.s32.totalorder %s33, %s36
    %p42 = scmp.eq.s32.totalorder %s11, 0
    %p43 = por %p41, %p42
    %p44 = scmp.ne.s32.totalorder %s33, %s36
    %p45 = scmp.eq.s32.totalorder %s16, 7
    %p46 = por %p44, %p45
    %p47 = scmp.ne.s32.totalorder %s36, %s37
    %p48 = scmp.eq.s32.totalorder %s16, 0
    %p49 = por %p47, %p48
    %p50 = scmp.ne.s32.totalorder %s36, %s37
    %p51 = scmp.eq.s32.totalorder %s17, 7
    %p52 = por %p50, %p51
    %p54 = scmp.ne.s32.totalorder %s37, %s53
    %p55 = scmp.eq.s32.totalorder %s17, 0
    %p56 = por %p54, %p55
    %s57 = ssub.s32 %s19, %s26
    %p58 = scmp.eq.s32.totalorder %s57, 0
    %s60 = sadd.s32 %s59, 1
    %s61 = scalar_select %p58, %s59, %s60
    %p64 = pneg %p58
    %p65 = scmp.eq.s32.totalorder %s11, 7
    %p66 = por %p64, %p65
    %p67 = scmp.ne.s32.totalorder %s59, %s62
    %p68 = scmp.eq.s32.totalorder %s11, 0
    %p69 = por %p67, %p68
    %p70 = scmp.ne.s32.totalorder %s59, %s62
    %p71 = scmp.eq.s32.totalorder %s16, 7
    %p72 = por %p70, %p71
    %p73 = scmp.ne.s32.totalorder %s62, %s63
    %p74 = scmp.eq.s32.totalorder %s16, 0
    %p75 = por %p73, %p74
    %p76 = scmp.ne.s32.totalorder %s62, %s63
    %p77 = scmp.eq.s32.totalorder %s17, 7
    %p78 = por %p76, %p77
    %p80 = scmp.ne.s32.totalorder %s63, %s79
    %p81 = scmp.eq.s32.totalorder %s17, 0
    %p82 = por %p80, %p81
    %s83 = ssub.s32 %s18, %s30
    %p84 = scmp.eq.s32.totalorder %s83, 0
    %s86 = sadd.s32 %s85, 1
    %s87 = scalar_select %p84, %s85, %s86
    %p90 = pneg %p84
    %p91 = scmp.eq.s32.totalorder %s11, 7
    %p92 = por %p90, %p91
    %p93 = scmp.ne.s32.totalorder %s85, %s88
    %p94 = scmp.eq.s32.totalorder %s11, 0
    %p95 = por %p93, %p94
    %p96 = scmp.ne.s32.totalorder %s85, %s88
    %p97 = scmp.eq.s32.totalorder %s16, 7
    %p98 = por %p96, %p97
    %p99 = scmp.ne.s32.totalorder %s88, %s89
    %p100 = scmp.eq.s32.totalorder %s16, 0
    %p101 = por %p99, %p100
    %p102 = scmp.ne.s32.totalorder %s88, %s89
    %p103 = scmp.eq.s32.totalorder %s17, 7
    %p104 = por %p102, %p103
    %p106 = scmp.ne.s32.totalorder %s89, %s105
    %p107 = scmp.eq.s32.totalorder %s17, 0
    %p108 = por %p106, %p107
    %s109 = ssub.s32 %s19, %s26
    %p110 = scmp.eq.s32.totalorder %s109, 0
    %s112 = sadd.s32 %s111, 1
    %s113 = scalar_select %p110, %s111, %s112
    %p116 = pneg %p110
    %p117 = scmp.eq.s32.totalorder %s11, 7
    %p118 = por %p116, %p117
    %p119 = scmp.ne.s32.totalorder %s111, %s114
    %p120 = scmp.eq.s32.totalorder %s11, 0
    %p121 = por %p119, %p120
    %p122 = scmp.ne.s32.totalorder %s111, %s114
    %p123 = scmp.eq.s32.totalorder %s16, 7
    %p124 = por %p122, %p123
    %p125 = scmp.ne.s32.totalorder %s114, %s115
    %p126 = scmp.eq.s32.totalorder %s16, 0
    %p127 = por %p125, %p126
    %p128 = scmp.ne.s32.totalorder %s114, %s115
    %p129 = scmp.eq.s32.totalorder %s17, 7
    %p130 = por %p128, %p129
    %p132 = scmp.ne.s32.totalorder %s115, %s131
    %p133 = scmp.eq.s32.totalorder %s17, 0
    %p134 = por %p132, %p133
    %s135 = ssub.s32 %s18, %s30
    %p136 = scmp.eq.s32.totalorder %s135, 0
    %s138 = sadd.s32 %s137, 1
    %s139 = scalar_select %p136, %s137, %s138
    %p142 = pneg %p136
    %p143 = scmp.eq.s32.totalorder %s11, 7
    %p144 = por %p142, %p143
    %p145 = scmp.ne.s32.totalorder %s137, %s140
    %p146 = scmp.eq.s32.totalorder %s11, 0
    %p147 = por %p145, %p146
    %p148 = scmp.ne.s32.totalorder %s137, %s140
    %p149 = scmp.eq.s32.totalorder %s16, 7
    %p150 = por %p148, %p149
    %p151 = scmp.ne.s32.totalorder %s140, %s141
    %p152 = scmp.eq.s32.totalorder %s16, 0
    %p153 = por %p151, %p152
    %p154 = scmp.ne.s32.totalorder %s140, %s141
    %p155 = scmp.eq.s32.totalorder %s17, 7
    %p156 = por %p154, %p155
    %p158 = scmp.ne.s32.totalorder %s141, %s157
    %p159 = scmp.eq.s32.totalorder %s17, 0
    %p160 = por %p158, %p159
    %s161 = ssub.s32 %s18, %s30
    %p162 = scmp.eq.s32.totalorder %s161, 0
    %s164 = sadd.s32 %s163, 1
    %s165 = scalar_select %p162, %s163, %s164
    %p168 = pneg %p162
    %p169 = scmp.eq.s32.totalorder %s11, 7
    %p170 = por %p168, %p169
    %p171 = scmp.ne.s32.totalorder %s163, %s166
    %p172 = scmp.eq.s32.totalorder %s11, 0
    %p173 = por %p171, %p172
    %p174 = scmp.ne.s32.totalorder %s163, %s166
    %p175 = scmp.eq.s32.totalorder %s16, 7
    %p176 = por %p174, %p175
    %p177 = scmp.ne.s32.totalorder %s166, %s167
    %p178 = scmp.eq.s32.totalorder %s16, 0
    %p179 = por %p177, %p178
    %p180 = scmp.ne.s32.totalorder %s166, %s167
    %p181 = scmp.eq.s32.totalorder %s17, 7
    %p182 = por %p180, %p181
    %p184 = scmp.ne.s32.totalorder %s167, %s183
    %p185 = scmp.eq.s32.totalorder %s17, 0
    %p186 = por %p184, %p185
    %p187 = scmp.le.s32.totalorder 1, %s11
    %p188 = scmp.lt.s32.totalorder %s11, 9
    %p189 = pnand %p187, %p188
    %p190 = pneg %p189
    // Predicated region
    $region9: #{tpu_custom_call.1} parent=5 // pred_check
      _
    $region10: #{tpu_custom_call.1} parent=5 // pred_check_branch
      %192 = sbr.rel (%p189) target = $region12
    $region11: #{tpu_custom_call.1} parent=5 // pred_region
      %s193 = ssub.s32 %s11, 1
    $region12: #{tpu_custom_call.1} parent=5 // pred_fallthru
      _
    %p194 = scmp.lt.s32.totalorder %s11, 8
    // Predicated region
    $region13: #{tpu_custom_call.1} parent=5 // pred_check
      %p195 = pneg %p194
    $region14: #{tpu_custom_call.1} parent=5 // pred_check_branch
      %197 = sbr.rel (%p195) target = $region16
    $region15: #{tpu_custom_call.1} parent=5 // pred_region
      // Predicated region
      $region17: #{tpu_custom_call.1} parent=15 // pred_check
        %p198 = pneg %p43
      $region18: #{tpu_custom_call.1} parent=15 // pred_check_branch
        %200 = sbr.rel (%p198) target = $region20
      $region19: #{tpu_custom_call.1} parent=15 // pred_region
        %s201 = smul.u32 8, %s18
        %p202 = scmp.lt.s32.totalorder %s201, 31
        %s203 = scalar_select %p202, %s201, 31
        %s204 = smul.addr %s203, 8
        %s205 = scalar_lea.vmem %s0, %s204
        %s206 = smul.u32 8, %s18
      $region20: #{tpu_custom_call.1} parent=15 // pred_fallthru
        _
      // Predicated region
      $region21: #{tpu_custom_call.1} parent=15 // pred_check
        %p207 = pneg %p69
      $region22: #{tpu_custom_call.1} parent=15 // pred_check_branch
        %209 = sbr.rel (%p207) target = $region24
      $region23: #{tpu_custom_call.1} parent=15 // pred_region
        %s210 = smul.u32 16, %s19
        %p211 = scmp.lt.s32.totalorder %s210, 31
        %s212 = scalar_select %p211, %s210, 31
        %s213 = smul.addr %s212, 8
        %s214 = scalar_lea.vmem %s1, %s213
        %s215 = smul.u32 16, %s19
      $region24: #{tpu_custom_call.1} parent=15 // pred_fallthru
        _
      // Predicated region
      $region25: #{tpu_custom_call.1} parent=15 // pred_check
        %p216 = pneg %p95
      $region26: #{tpu_custom_call.1} parent=15 // pred_check_branch
        %218 = sbr.rel (%p216) target = $region28
      $region27: #{tpu_custom_call.1} parent=15 // pred_region
        %s219 = smul.u32 8, %s18
        %p220 = scmp.lt.s32.totalorder %s219, 31
        %s221 = scalar_select %p220, %s219, 31
        %s222 = smul.addr %s221, 8
        %s223 = scalar_lea.vmem %s2, %s222
        %s224 = smul.u32 8, %s18
      $region28: #{tpu_custom_call.1} parent=15 // pred_fallthru
        _
      // Predicated region
      $region29: #{tpu_custom_call.1} parent=15 // pred_check
        %p225 = pneg %p121
      $region30: #{tpu_custom_call.1} parent=15 // pred_check_branch
        %227 = sbr.rel (%p225) target = $region32
      $region31: #{tpu_custom_call.1} parent=15 // pred_region
        %p228 = scmp.lt.s32.totalorder %s19, 1
        %s229 = scalar_select %p228, %s19, 1
        %s230 = scalar_lea.vmem %s3, %s229
      $region32: #{tpu_custom_call.1} parent=15 // pred_fallthru
        _
      // Predicated region
      $region33: #{tpu_custom_call.1} parent=15 // pred_check
        %p231 = pneg %p147
      $region34: #{tpu_custom_call.1} parent=15 // pred_check_branch
        %233 = sbr.rel (%p231) target = $region36
      $region35: #{tpu_custom_call.1} parent=15 // pred_region
        %s234 = smul.u32 8, %s18
        %p235 = scmp.lt.s32.totalorder %s234, 31
        %s236 = scalar_select %p235, %s234, 31
        %s237 = smul.addr %s236, 8
        %s238 = scalar_lea.vmem %s4, %s237
        %s239 = smul.u32 8, %s18
      $region36: #{tpu_custom_call.1} parent=15 // pred_fallthru
        _
    $region16: #{tpu_custom_call.1} parent=5 // pred_fallthru
      _
    %p240 = scmp.le.s32.totalorder 1, %s11
    %p241 = scmp.lt.s32.totalorder %s11, 9
    %p242 = pnand %p240, %p241
    %p243 = pneg %p242
    // Predicated region
    $region37: #{tpu_custom_call.1} parent=5 // pred_check
      _
    $region38: #{tpu_custom_call.1} parent=5 // pred_check_branch
      %245 = sbr.rel (%p242) target = $region40
    $region39: #{tpu_custom_call.1} parent=5 // pred_region
      %s246 = ssub.s32 %s11, 1
      %s247 = smul.u32 8, %s20
      %p248 = scmp.lt.s32.totalorder %s247, 31
      %s249 = scalar_select %p248, %s247, 31
      %s250 = smul.addr %s249, 8
      %s251 = scalar_lea.vmem %s0, %s250
      %p252 = pneg %p49
      %p253 = pneg %p46
      %s254 = smul.u32 16, %s21
      %p255 = scmp.lt.s32.totalorder %s254, 31
      %s256 = scalar_select %p255, %s254, 31
      %s257 = smul.addr %s256, 8
      %s258 = scalar_lea.vmem %s1, %s257
      %p259 = pneg %p75
      %p260 = pneg %p72
      %s261 = smul.u32 8, %s20
      %p262 = scmp.lt.s32.totalorder %s261, 31
      %s263 = scalar_select %p262, %s261, 31
      %s264 = smul.addr %s263, 8
      %s265 = scalar_lea.vmem %s2, %s264
      %p266 = pneg %p101
      %p267 = pneg %p98
      %p268 = scmp.lt.s32.totalorder %s21, 1
      %s269 = scalar_select %p268, %s21, 1
      %s270 = scalar_lea.vmem %s3, %s269
      %p271 = pneg %p127
      %p272 = pneg %p124
      %s273 = smul.u32 8, %s20
      %p274 = scmp.lt.s32.totalorder %s273, 31
      %s275 = scalar_select %p274, %s273, 31
      %s276 = smul.addr %s275, 8
      %s277 = scalar_lea.vmem %s4, %s276
      %p278 = pneg %p153
      %p279 = pneg %p150
      %p280 = pneg %p179
      %p281 = pneg %p176
      %s282 = smul.u32 8, %s20
      %p283 = scmp.lt.s32.totalorder %s282, 31
      %s284 = scalar_select %p283, %s282, 31
      %s285 = smul.addr %s284, 8
      %s286 = scalar_lea.vmem %s5, %s285
      %s287 = smul.u32 8, %s20
      %p288 = scmp.lt.s32.totalorder %s287, 31
      %s289 = scalar_select %p288, %s287, 31
      %s290 = smul.addr %s289, 8
      %s291 = scalar_lea.vmem %s0, %s290
      %s292 = smul.u32 8, %s20
      %s293 = smul.u32 16, %s21
      %p294 = scmp.lt.s32.totalorder %s293, 31
      %s295 = scalar_select %p294, %s293, 31
      %s296 = smul.addr %s295, 8
      %s297 = scalar_lea.vmem %s1, %s296
      %s298 = smul.u32 16, %s21
      %s299 = smul.u32 8, %s20
      %p300 = scmp.lt.s32.totalorder %s299, 31
      %s301 = scalar_select %p300, %s299, 31
      %s302 = smul.addr %s301, 8
      %s303 = scalar_lea.vmem %s2, %s302
      %s304 = smul.u32 8, %s20
      %p305 = scmp.lt.s32.totalorder %s21, 1
      %s306 = scalar_select %p305, %s21, 1
      %s307 = scalar_lea.vmem %s3, %s306
      %s308 = smul.u32 8, %s20
      %p309 = scmp.lt.s32.totalorder %s308, 31
      %s310 = scalar_select %p309, %s308, 31
      %s311 = smul.addr %s310, 8
      %s312 = scalar_lea.vmem %s4, %s311
      %s313 = smul.u32 8, %s20
      %s314 = smul.u32 8, %s20
      %p315 = scmp.lt.s32.totalorder %s314, 31
      %s316 = scalar_select %p315, %s314, 31
      %s317 = smul.addr %s316, 8
      %s318 = scalar_lea.vmem %s5, %s317
      %s319 = smul.u32 8, %s20
      %p320 = scmp.eq.s32.totalorder %s21, 0
      // Predicated region
      $region41: #{tpu_custom_call.1} parent=39 // pred_check
        %p321 = pneg %p320
      $region42: #{tpu_custom_call.1} parent=39 // pred_check_branch
        %323 = sbr.rel (%p321) target = $region44
      $region43: #{tpu_custom_call.1} parent=39 // pred_region
        %vm324 = vcmask 7168
        %325 = vst.msk [vmem:[#allocation2] sm:$0xff] %vm324, -inf
        %326 = vst.msk [vmem:[#allocation2 + $0x8] sm:$0xff] %vm324, -inf
        %327 = vst.msk [vmem:[#allocation2 + $0x10] sm:$0xff] %vm324, -inf
        %328 = vst.msk [vmem:[#allocation2 + $0x18] sm:$0xff] %vm324, -inf
        %329 = vst.msk [vmem:[#allocation2 + $0x20] sm:$0xff] %vm324, -inf
        %330 = vst.msk [vmem:[#allocation2 + $0x28] sm:$0xff] %vm324, -inf
        %331 = vst.msk [vmem:[#allocation2 + $0x30] sm:$0xff] %vm324, -inf
        %332 = vst.msk [vmem:[#allocation2 + $0x38] sm:$0xff] %vm324, -inf
        %333 = vst.msk [vmem:[#allocation3] sm:$0xff] %vm324, 0.0
        %334 = vst.msk [vmem:[#allocation3 + $0x8] sm:$0xff] %vm324, 0.0
        %335 = vst.msk [vmem:[#allocation3 + $0x10] sm:$0xff] %vm324, 0.0
        %336 = vst.msk [vmem:[#allocation3 + $0x18] sm:$0xff] %vm324, 0.0
        %337 = vst.msk [vmem:[#allocation3 + $0x20] sm:$0xff] %vm324, 0.0
        %338 = vst.msk [vmem:[#allocation3 + $0x28] sm:$0xff] %vm324, 0.0
        %339 = vst.msk [vmem:[#allocation3 + $0x30] sm:$0xff] %vm324, 0.0
        %340 = vst.msk [vmem:[#allocation3 + $0x38] sm:$0xff] %vm324, 0.0
        %341 = vst.msk [vmem:[#allocation4] sm:$0xff] %vm324, 0.0
        %342 = vst.msk [vmem:[#allocation4 + $0x8] sm:$0xff] %vm324, 0.0
        %343 = vst.msk [vmem:[#allocation4 + $0x10] sm:$0xff] %vm324, 0.0
        %344 = vst.msk [vmem:[#allocation4 + $0x18] sm:$0xff] %vm324, 0.0
        %345 = vst.msk [vmem:[#allocation4 + $0x20] sm:$0xff] %vm324, 0.0
        %346 = vst.msk [vmem:[#allocation4 + $0x28] sm:$0xff] %vm324, 0.0
        %347 = vst.msk [vmem:[#allocation4 + $0x30] sm:$0xff] %vm324, 0.0
        %348 = vst.msk [vmem:[#allocation4 + $0x38] sm:$0xff] %vm324, 0.0
      $region44: #{tpu_custom_call.1} parent=39 // pred_fallthru
        _
      %v349 = vld [vmem:[%s291] sm:$0xff]
      %v350 = vld [vmem:[%s291 + $0x8] sm:$0xff]
      %v351 = vld [vmem:[%s291 + $0x10] sm:$0xff]
      %v352 = vld [vmem:[%s291 + $0x18] sm:$0xff]
      %v353 = vld [vmem:[%s291 + $0x20] sm:$0xff]
      %v354 = vld [vmem:[%s291 + $0x28] sm:$0xff]
      %v355 = vld [vmem:[%s291 + $0x30] sm:$0xff]
      %v356 = vld [vmem:[%s291 + $0x38] sm:$0xff]
      %v357 = vld [vmem:[%s297] sm:$0xff]
      %v358 = vld [vmem:[%s297 + $0x8] sm:$0xff]
      %v359 = vld [vmem:[%s297 + $0x10] sm:$0xff]
      %v360 = vld [vmem:[%s297 + $0x18] sm:$0xff]
      %v361 = vld [vmem:[%s297 + $0x20] sm:$0xff]
      %v362 = vld [vmem:[%s297 + $0x28] sm:$0xff]
      %v363 = vld [vmem:[%s297 + $0x30] sm:$0xff]
      %v364 = vld [vmem:[%s297 + $0x38] sm:$0xff]
      %v365 = vld [vmem:[%s297 + $0x40] sm:$0xff]
      %v366 = vld [vmem:[%s297 + $0x48] sm:$0xff]
      %v367 = vld [vmem:[%s297 + $0x50] sm:$0xff]
      %v368 = vld [vmem:[%s297 + $0x58] sm:$0xff]
      %v369 = vld [vmem:[%s297 + $0x60] sm:$0xff]
      %v370 = vld [vmem:[%s297 + $0x68] sm:$0xff]
      %v371 = vld [vmem:[%s297 + $0x70] sm:$0xff]
      %v372 = vld [vmem:[%s297 + $0x78] sm:$0xff]
      %373 = vmatprep.subr.mxu0 0.0
      %374 = vmatpush1.xpose.msra.mxu0 %v357
      %375 = vmatprep.subr.mxu0 0.0
      %376 = vmatpush1.xpose.msra.mxu0 %v358
      %377 = vmatprep.subr.mxu0 0.0
      %378 = vmatpush1.xpose.msra.mxu0 %v359
      %379 = vmatprep.subr.mxu0 0.0
      %380 = vmatpush1.xpose.msra.mxu0 %v360
      %381 = vmatprep.subr.mxu0 0.0
      %382 = vmatpush1.xpose.msra.mxu0 %v361
      %383 = vmatprep.subr.mxu0 0.0
      %384 = vmatpush1.xpose.msra.mxu0 %v362
      %385 = vmatprep.subr.mxu0 0.0
      %386 = vmatpush1.xpose.msra.mxu0 %v363
      %387 = vmatprep.subr.mxu0 0.0
      %388 = vmatpush1.xpose.msra.mxu0 %v364
      %389 = vmatprep.subr.mxu0 0.0
      %390 = vmatpush1.xpose.msra.mxu0 %v365
      %391 = vmatprep.subr.mxu0 0.0
      %392 = vmatpush1.xpose.msra.mxu0 %v366
      %393 = vmatprep.subr.mxu0 0.0
      %394 = vmatpush1.xpose.msra.mxu0 %v367
      %395 = vmatprep.subr.mxu0 0.0
      %396 = vmatpush1.xpose.msra.mxu0 %v368
      %397 = vmatprep.subr.mxu0 0.0
      %398 = vmatpush1.xpose.msra.mxu0 %v369
      %399 = vmatprep.subr.mxu0 0.0
      %400 = vmatpush1.xpose.msra.mxu0 %v370
      %401 = vmatprep.subr.mxu0 0.0
      %402 = vmatpush1.xpose.msra.mxu0 %v371
      %403 = vmatprep.subr.mxu0 0.0
      %404 = vmatpush1.xpose.msra.mxu0 %v372
      %405 = vmatprep.subr.mxu0 0.0
      %406 = vmatpush1.xpose.msra.mxu0 0.0
      %407 = vmatprep.subr.mxu0 0.0
      %408 = vmatpush1.xpose.msra.mxu0 0.0
      %409 = vmatprep.subr.mxu0 0.0
      %410 = vmatpush1.xpose.msra.mxu0 0.0
      %411 = vmatprep.subr.mxu0 0.0
      %412 = vmatpush1.xpose.msra.mxu0 0.0
      %413 = vmatprep.subr.mxu0 0.0
      %414 = vmatpush1.xpose.msra.mxu0 0.0
      %415 = vmatprep.subr.mxu0 0.0
      %416 = vmatpush1.xpose.msra.mxu0 0.0
      %417 = vmatprep.subr.mxu0 0.0
      %418 = vmatpush1.xpose.msra.mxu0 0.0
      %419 = vmatprep.subr.mxu0 0.0
      %420 = vmatpush1.xpose.msra.mxu0 0.0
      %421 = vmatprep.subr.mxu0 0.0
      %422 = vmatpush1.xpose.msra.mxu0 0.0
      %423 = vmatprep.subr.mxu0 0.0
      %424 = vmatpush1.xpose.msra.mxu0 0.0
      %425 = vmatprep.subr.mxu0 0.0
      %426 = vmatpush1.xpose.msra.mxu0 0.0
      %427 = vmatprep.subr.mxu0 0.0
      %428 = vmatpush1.xpose.msra.mxu0 0.0
      %429 = vmatprep.subr.mxu0 0.0
      %430 = vmatpush1.xpose.msra.mxu0 0.0
      %431 = vmatprep.subr.mxu0 0.0
      %432 = vmatpush1.xpose.msra.mxu0 0.0
      %433 = vmatprep.subr.mxu0 0.0
      %434 = vmatpush1.xpose.msra.mxu0 0.0
      %435 = vmatprep.subr.mxu0 0.0
      %436 = vmatpush1.xpose.msra.mxu0 0.0
      %437 = vmatprep.mubr.f32.mxu0 0.0
      %438 = vmatmul.mubr.f32.gmra.mrb[0].mxu0 %v349
      %v439 = vpop.f32.mrb[0].mxu0
      %v440 = vadd.f32 0.0, %v439
      %v441 = vpop.f32.mrb[0].mxu0
      %442 = vmatprep.mubr.f32.mxu0 0.0
      %443 = vmatmul.mubr.f32.gmra.mrb[0].mxu0 %v350
      %v444 = vpop.f32.mrb[0].mxu0
      %v445 = vadd.f32 0.0, %v444
      %v446 = vpop.f32.mrb[0].mxu0
      %447 = vmatprep.mubr.f32.mxu0 0.0
      %448 = vmatmul.mubr.f32.gmra.mrb[0].mxu0 %v351
      %v449 = vpop.f32.mrb[0].mxu0
      %v450 = vadd.f32 0.0, %v449
      %v451 = vpop.f32.mrb[0].mxu0
      %452 = vmatprep.mubr.f32.mxu0 0.0
      %453 = vmatmul.mubr.f32.gmra.mrb[0].mxu0 %v352
      %v454 = vpop.f32.mrb[0].mxu0
      %v455 = vadd.f32 0.0, %v454
      %v456 = vpop.f32.mrb[0].mxu0
      %457 = vmatprep.mubr.f32.mxu0 0.0
      %458 = vmatmul.mubr.f32.gmra.mrb[0].mxu0 %v353
      %v459 = vpop.f32.mrb[0].mxu0
      %v460 = vadd.f32 0.0, %v459
      %v461 = vpop.f32.mrb[0].mxu0
      %462 = vmatprep.mubr.f32.mxu0 0.0
      %463 = vmatmul.mubr.f32.gmra.mrb[0].mxu0 %v354
      %v464 = vpop.f32.mrb[0].mxu0
      %v465 = vadd.f32 0.0, %v464
      %v466 = vpop.f32.mrb[0].mxu0
      %467 = vmatprep.mubr.f32.mxu0 0.0
      %468 = vmatmul.mubr.f32.gmra.mrb[0].mxu0 %v355
      %v469 = vpop.f32.mrb[0].mxu0
      %v470 = vadd.f32 0.0, %v469
      %v471 = vpop.f32.mrb[0].mxu0
      %472 = vmatprep.mubr.f32.mxu0 0.0
      %473 = vmatmul.mubr.f32.gmra.mrb[0].mxu0 %v356
      %v474 = vpop.f32.mrb[0].mxu0
      %v475 = vadd.f32 0.0, %v474
      %v476 = vpop.f32.mrb[0].mxu0
      %477 = vdwg.mxu0
      %v478 = vld [vmem:[%s303] sm:$0xff]
      %v479 = vld [vmem:[%s303 + $0x8] sm:$0xff]
      %v480 = vld [vmem:[%s303 + $0x10] sm:$0xff]
      %v481 = vld [vmem:[%s303 + $0x18] sm:$0xff]
      %v482 = vld [vmem:[%s303 + $0x20] sm:$0xff]
      %v483 = vld [vmem:[%s303 + $0x28] sm:$0xff]
      %v484 = vld [vmem:[%s303 + $0x30] sm:$0xff]
      %v485 = vld [vmem:[%s303 + $0x38] sm:$0xff]
      %v486 = vld [vmem:[%s307] sm:$0x1]
      %487 = vset.pattern.permute.xlu0 0
      %488 = vperm.xlu0 %487, %v478
      %v489 = vpop.permute.xlu0 %488
      %490 = vset.pattern.permute.xlu0 0
      %491 = vperm.xlu0 %490, %v479
      %v492 = vpop.permute.xlu0 %491
      %493 = vset.pattern.permute.xlu0 0
      %494 = vperm.xlu0 %493, %v480
      %v495 = vpop.permute.xlu0 %494
      %496 = vset.pattern.permute.xlu0 0
      %497 = vperm.xlu0 %496, %v481
      %v498 = vpop.permute.xlu0 %497
      %499 = vset.pattern.permute.xlu0 0
      %500 = vperm.xlu0 %499, %v482
      %v501 = vpop.permute.xlu0 %500
      %502 = vset.pattern.permute.xlu0 0
      %503 = vperm.xlu0 %502, %v483
      %v504 = vpop.permute.xlu0 %503
      %505 = vset.pattern.permute.xlu0 0
      %506 = vperm.xlu0 %505, %v484
      %v507 = vpop.permute.xlu0 %506
      %508 = vset.pattern.permute.xlu0 0
      %509 = vperm.xlu0 %508, %v485
      %v510 = vpop.permute.xlu0 %509
      %v511 = vlaneseq
      %v512 = vshrl.u32 %v511, 7
      %v513 = vsub.s32 0, %v512
      %v514 = vrot.slane %v486, %v513
      %vm515 = vcmp.eq.s32.totalorder %v489, %v514
      %vm516 = vcmp.eq.s32.totalorder %v492, %v514
      %vm517 = vcmp.eq.s32.totalorder %v495, %v514
      %vm518 = vcmp.eq.s32.totalorder %v498, %v514
      %vm519 = vcmp.eq.s32.totalorder %v501, %v514
      %vm520 = vcmp.eq.s32.totalorder %v504, %v514
      %vm521 = vcmp.eq.s32.totalorder %v507, %v514
      %vm522 = vcmp.eq.s32.totalorder %v510, %v514
      %523 = vmax.xlane.f32.xlu0 %v440
      %v524 = vpop.xlane.xlu0 %523
      %525 = vmax.xlane.f32.xlu0 %v445
      %v526 = vpop.xlane.xlu0 %525
      %527 = vmax.xlane.f32.xlu0 %v450
      %v528 = vpop.xlane.xlu0 %527
      %529 = vmax.xlane.f32.xlu0 %v455
      %v530 = vpop.xlane.xlu0 %529
      %531 = vmax.xlane.f32.xlu0 %v460
      %v532 = vpop.xlane.xlu0 %531
      %533 = vmax.xlane.f32.xlu0 %v465
      %v534 = vpop.xlane.xlu0 %533
      %535 = vmax.xlane.f32.xlu0 %v470
      %v536 = vpop.xlane.xlu0 %535
      %537 = vmax.xlane.f32.xlu0 %v475
      %v538 = vpop.xlane.xlu0 %537
      %v539 = vld [vmem:[#allocation2] sm:$0xff]
      %v540 = vld [vmem:[#allocation2 + $0x8] sm:$0xff]
      %v541 = vld [vmem:[#allocation2 + $0x10] sm:$0xff]
      %v542 = vld [vmem:[#allocation2 + $0x18] sm:$0xff]
      %v543 = vld [vmem:[#allocation2 + $0x20] sm:$0xff]
      %v544 = vld [vmem:[#allocation2 + $0x28] sm:$0xff]
      %v545 = vld [vmem:[#allocation2 + $0x30] sm:$0xff]
      %v546 = vld [vmem:[#allocation2 + $0x38] sm:$0xff]
      %v547 = vmax.f32 %v539, %v524
      %v548 = vmax.f32 %v540, %v526
      %v549 = vmax.f32 %v541, %v528
      %v550 = vmax.f32 %v542, %v530
      %v551 = vmax.f32 %v543, %v532
      %v552 = vmax.f32 %v544, %v534
      %v553 = vmax.f32 %v545, %v536
      %v554 = vmax.f32 %v546, %v538
      %v555 = vsub.f32 %v539, %v547
      %v556 = vsub.f32 %v540, %v548
      %v557 = vsub.f32 %v541, %v549
      %v558 = vsub.f32 %v542, %v550
      %v559 = vsub.f32 %v543, %v551
      %v560 = vsub.f32 %v544, %v552
      %v561 = vsub.f32 %v545, %v553
      %v562 = vsub.f32 %v546, %v554
      %v563 = vmul.f32 %v555, 1.442695
      %v564 = vpow.pop %v563
      %v565 = vmul.f32 %v556, 1.442695
      %v566 = vpow.pop %v565
      %v567 = vmul.f32 %v557, 1.442695
      %v568 = vpow.pop %v567
      %v569 = vmul.f32 %v558, 1.442695
      %v570 = vpow.pop %v569
      %v571 = vmul.f32 %v559, 1.442695
      %v572 = vpow.pop %v571
      %v573 = vmul.f32 %v560, 1.442695
      %v574 = vpow.pop %v573
      %v575 = vmul.f32 %v561, 1.442695
      %v576 = vpow.pop %v575
      %v577 = vmul.f32 %v562, 1.442695
      %v578 = vpow.pop %v577
      %vm579 = vcmask 7168
      %580 = vst.msk [vmem:[#allocation2] sm:$0xff] %vm579, %v547
      %581 = vst.msk [vmem:[#allocation2 + $0x8] sm:$0xff] %vm579, %v548
      %582 = vst.msk [vmem:[#allocation2 + $0x10] sm:$0xff] %vm579, %v549
      %583 = vst.msk [vmem:[#allocation2 + $0x18] sm:$0xff] %vm579, %v550
      %584 = vst.msk [vmem:[#allocation2 + $0x20] sm:$0xff] %vm579, %v551
      %585 = vst.msk [vmem:[#allocation2 + $0x28] sm:$0xff] %vm579, %v552
      %586 = vst.msk [vmem:[#allocation2 + $0x30] sm:$0xff] %vm579, %v553
      %587 = vst.msk [vmem:[#allocation2 + $0x38] sm:$0xff] %vm579, %v554
      %s588 = smul.u32 %s20, 64
      %s589 = smul.u32 %s21, 128
      %s590 = sadd.s32 %s589, 128
      %p591 = scmp.lt.s32.totalorder %s588, %s590
      %s592 = sadd.s32 %s588, 64
      %p593 = scmp.lt.s32.totalorder %s589, %s592
      %p594 = pnand %p591, %p593
      %p595 = pneg %p594
      // Predicated region
      $region45: #{tpu_custom_call.1} parent=39 // pred_check
        _
      $region46: #{tpu_custom_call.1} parent=39 // pred_check_branch
        %597 = sbr.rel (%p594) target = $region48
      $region47: #{tpu_custom_call.1} parent=39 // pred_region
        %v598 = vlaneseq
        %v599 = vshrl.u32 %v598, 7
        %v600 = vadd.s32 %v599, 8
        %v601 = vadd.s32 %v599, 16
        %v602 = vadd.s32 %v599, 24
        %v603 = vadd.s32 %v599, 32
        %v604 = vadd.s32 %v599, 40
        %v605 = vadd.s32 %v599, 48
        %v606 = vadd.s32 %v599, 56
        %v607 = vstv %s588
        %v608 = vadd.s32 %v607, %v599
        %v609 = vadd.s32 %v607, %v600
        %v610 = vadd.s32 %v607, %v601
        %v611 = vadd.s32 %v607, %v602
        %v612 = vadd.s32 %v607, %v603
        %v613 = vadd.s32 %v607, %v604
        %v614 = vadd.s32 %v607, %v605
        %v615 = vadd.s32 %v607, %v606
        %v616 = vlaneseq
        %v617 = vand.u32 %v616, 127
        %v618 = vstv %s589
        %v619 = vadd.s32 %v618, %v617
        %vm620 = vcmp.ne.s32.totalorder %v608, %v619
        %vm621 = vcmp.ne.s32.totalorder %v609, %v619
        %vm622 = vcmp.ne.s32.totalorder %v610, %v619
        %vm623 = vcmp.ne.s32.totalorder %v611, %v619
        %vm624 = vcmp.ne.s32.totalorder %v612, %v619
        %vm625 = vcmp.ne.s32.totalorder %v613, %v619
        %vm626 = vcmp.ne.s32.totalorder %v614, %v619
        %vm627 = vcmp.ne.s32.totalorder %v615, %v619
        %629 = vset.pattern.permute.xlu0 0
        %630 = vperm.xlu0 %629, %v547
        %v631 = vpop.permute.xlu0 %630
        %634 = vset.pattern.permute.xlu0 0
        %635 = vperm.xlu0 %634, %v548
        %v636 = vpop.permute.xlu0 %635
        %639 = vset.pattern.permute.xlu0 0
        %640 = vperm.xlu0 %639, %v549
        %v641 = vpop.permute.xlu0 %640
        %644 = vset.pattern.permute.xlu0 0
        %645 = vperm.xlu0 %644, %v550
        %v646 = vpop.permute.xlu0 %645
        %649 = vset.pattern.permute.xlu0 0
        %650 = vperm.xlu0 %649, %v551
        %v651 = vpop.permute.xlu0 %650
        %654 = vset.pattern.permute.xlu0 0
        %655 = vperm.xlu0 %654, %v552
        %v656 = vpop.permute.xlu0 %655
        %659 = vset.pattern.permute.xlu0 0
        %660 = vperm.xlu0 %659, %v553
        %v661 = vpop.permute.xlu0 %660
        %664 = vset.pattern.permute.xlu0 0
        %665 = vperm.xlu0 %664, %v554
        %v666 = vpop.permute.xlu0 %665
        %v668 = vsub.f32 %v440, %v631
        %v669 = vsub.f32 %v445, %v636
        %v670 = vsub.f32 %v450, %v641
        %v671 = vsub.f32 %v455, %v646
        %v672 = vsub.f32 %v460, %v651
        %v673 = vsub.f32 %v465, %v656
        %v674 = vsub.f32 %v470, %v661
        %v675 = vsub.f32 %v475, %v666
        %v676 = vmul.f32 %v668, 1.442695
        %v677 = vpow.pop %v676
        %v678 = vmul.f32 %v669, 1.442695
        %v679 = vpow.pop %v678
        %v680 = vmul.f32 %v670, 1.442695
        %v681 = vpow.pop %v680
        %v682 = vmul.f32 %v671, 1.442695
        %v683 = vpow.pop %v682
        %v684 = vmul.f32 %v672, 1.442695
        %v685 = vpow.pop %v684
        %v686 = vmul.f32 %v673, 1.442695
        %v687 = vpow.pop %v686
        %v688 = vmul.f32 %v674, 1.442695
        %v689 = vpow.pop %v688
        %v690 = vmul.f32 %v675, 1.442695
        %v691 = vpow.pop %v690
        %v692 = vsel %vm620, %v677, 0.0
        %v693 = vsel %vm621, %v679, 0.0
        %v694 = vsel %vm622, %v681, 0.0
        %v695 = vsel %vm623, %v683, 0.0
        %v696 = vsel %vm624, %v685, 0.0
        %v697 = vsel %vm625, %v687, 0.0
        %v698 = vsel %vm626, %v689, 0.0
        %v699 = vsel %vm627, %v691, 0.0
        %v700 = vld [vmem:[#allocation3] sm:$0xff]
        %v701 = vld [vmem:[#allocation3 + $0x8] sm:$0xff]
        %v702 = vld [vmem:[#allocation3 + $0x10] sm:$0xff]
        %v703 = vld [vmem:[#allocation3 + $0x18] sm:$0xff]
        %v704 = vld [vmem:[#allocation3 + $0x20] sm:$0xff]
        %v705 = vld [vmem:[#allocation3 + $0x28] sm:$0xff]
        %v706 = vld [vmem:[#allocation3 + $0x30] sm:$0xff]
        %v707 = vld [vmem:[#allocation3 + $0x38] sm:$0xff]
        %v708 = vmul.f32 %v564, %v700
        %v709 = vmul.f32 %v566, %v701
        %v710 = vmul.f32 %v568, %v702
        %v711 = vmul.f32 %v570, %v703
        %v712 = vmul.f32 %v572, %v704
        %v713 = vmul.f32 %v574, %v705
        %v714 = vmul.f32 %v576, %v706
        %v715 = vmul.f32 %v578, %v707
        %716 = vadd.xlane.f32.xlu0 %v692
        %v717 = vpop.xlane.xlu0 %716
        %718 = vadd.xlane.f32.xlu0 %v693
        %v719 = vpop.xlane.xlu0 %718
        %720 = vadd.xlane.f32.xlu0 %v694
        %v721 = vpop.xlane.xlu0 %720
        %722 = vadd.xlane.f32.xlu0 %v695
        %v723 = vpop.xlane.xlu0 %722
        %724 = vadd.xlane.f32.xlu0 %v696
        %v725 = vpop.xlane.xlu0 %724
        %726 = vadd.xlane.f32.xlu0 %v697
        %v727 = vpop.xlane.xlu0 %726
        %728 = vadd.xlane.f32.xlu0 %v698
        %v729 = vpop.xlane.xlu0 %728
        %730 = vadd.xlane.f32.xlu0 %v699
        %v731 = vpop.xlane.xlu0 %730
        %v732 = vadd.f32 %v708, %v717
        %v733 = vadd.f32 %v709, %v719
        %v734 = vadd.f32 %v710, %v721
        %v735 = vadd.f32 %v711, %v723
        %v736 = vadd.f32 %v712, %v725
        %v737 = vadd.f32 %v713, %v727
        %v738 = vadd.f32 %v714, %v729
        %v739 = vadd.f32 %v715, %v731
        %740 = vst.msk [vmem:[#allocation3] sm:$0xff] %vm579, %v732
        %741 = vst.msk [vmem:[#allocation3 + $0x8] sm:$0xff] %vm579, %v733
        %742 = vst.msk [vmem:[#allocation3 + $0x10] sm:$0xff] %vm579, %v734
        %743 = vst.msk [vmem:[#allocation3 + $0x18] sm:$0xff] %vm579, %v735
        %744 = vst.msk [vmem:[#allocation3 + $0x20] sm:$0xff] %vm579, %v736
        %745 = vst.msk [vmem:[#allocation3 + $0x28] sm:$0xff] %vm579, %v737
        %746 = vst.msk [vmem:[#allocation3 + $0x30] sm:$0xff] %vm579, %v738
        %747 = vst.msk [vmem:[#allocation3 + $0x38] sm:$0xff] %vm579, %v739
        %vm748 = vmand %vm515, %vm620
        %vm749 = vmand %vm516, %vm621
        %vm750 = vmand %vm517, %vm622
        %vm751 = vmand %vm518, %vm623
        %vm752 = vmand %vm519, %vm624
        %vm753 = vmand %vm520, %vm625
        %vm754 = vmand %vm521, %vm626
        %vm755 = vmand %vm522, %vm627
        %v756 = vld [vmem:[#allocation4] sm:$0xff]
        %v757 = vld [vmem:[#allocation4 + $0x8] sm:$0xff]
        %v758 = vld [vmem:[#allocation4 + $0x10] sm:$0xff]
        %v759 = vld [vmem:[#allocation4 + $0x18] sm:$0xff]
        %v760 = vld [vmem:[#allocation4 + $0x20] sm:$0xff]
        %v761 = vld [vmem:[#allocation4 + $0x28] sm:$0xff]
        %v762 = vld [vmem:[#allocation4 + $0x30] sm:$0xff]
        %v763 = vld [vmem:[#allocation4 + $0x38] sm:$0xff]
        %v764 = vsel %vm748, %v440, 0.0
        %v765 = vsel %vm749, %v445, 0.0
        %v766 = vsel %vm750, %v450, 0.0
        %v767 = vsel %vm751, %v455, 0.0
        %v768 = vsel %vm752, %v460, 0.0
        %v769 = vsel %vm753, %v465, 0.0
        %v770 = vsel %vm754, %v470, 0.0
        %v771 = vsel %vm755, %v475, 0.0
        %772 = vadd.xlane.f32.xlu0 %v764
        %v773 = vpop.xlane.xlu0 %772
        %774 = vadd.xlane.f32.xlu0 %v765
        %v775 = vpop.xlane.xlu0 %774
        %776 = vadd.xlane.f32.xlu0 %v766
        %v777 = vpop.xlane.xlu0 %776
        %778 = vadd.xlane.f32.xlu0 %v767
        %v779 = vpop.xlane.xlu0 %778
        %780 = vadd.xlane.f32.xlu0 %v768
        %v781 = vpop.xlane.xlu0 %780
        %782 = vadd.xlane.f32.xlu0 %v769
        %v783 = vpop.xlane.xlu0 %782
        %784 = vadd.xlane.f32.xlu0 %v770
        %v785 = vpop.xlane.xlu0 %784
        %786 = vadd.xlane.f32.xlu0 %v771
        %v787 = vpop.xlane.xlu0 %786
        %v788 = vadd.f32 %v756, %v773
        %v789 = vadd.f32 %v757, %v775
        %v790 = vadd.f32 %v758, %v777
        %v791 = vadd.f32 %v759, %v779
        %v792 = vadd.f32 %v760, %v781
        %v793 = vadd.f32 %v761, %v783
        %v794 = vadd.f32 %v762, %v785
        %v795 = vadd.f32 %v763, %v787
        %796 = vst.msk [vmem:[#allocation4] sm:$0xff] %vm579, %v788
        %797 = vst.msk [vmem:[#allocation4 + $0x8] sm:$0xff] %vm579, %v789
        %798 = vst.msk [vmem:[#allocation4 + $0x10] sm:$0xff] %vm579, %v790
        %799 = vst.msk [vmem:[#allocation4 + $0x18] sm:$0xff] %vm579, %v791
        %800 = vst.msk [vmem:[#allocation4 + $0x20] sm:$0xff] %vm579, %v792
        %801 = vst.msk [vmem:[#allocation4 + $0x28] sm:$0xff] %vm579, %v793
        %802 = vst.msk [vmem:[#allocation4 + $0x30] sm:$0xff] %vm579, %v794
        %803 = vst.msk [vmem:[#allocation4 + $0x38] sm:$0xff] %vm579, %v795
      $region48: #{tpu_custom_call.1} parent=39 // pred_fallthru
        _
      %p804 = pneg %p595
      // Predicated region
      $region49: #{tpu_custom_call.1} parent=39 // pred_check
        _
      $region50: #{tpu_custom_call.1} parent=39 // pred_check_branch
        %806 = sbr.rel (%p595) target = $region52
      $region51: #{tpu_custom_call.1} parent=39 // pred_region
        %808 = vset.pattern.permute.xlu0 0
        %809 = vperm.xlu0 %808, %v547
        %v810 = vpop.permute.xlu0 %809
        %813 = vset.pattern.permute.xlu0 0
        %814 = vperm.xlu0 %813, %v548
        %v815 = vpop.permute.xlu0 %814
        %818 = vset.pattern.permute.xlu0 0
        %819 = vperm.xlu0 %818, %v549
        %v820 = vpop.permute.xlu0 %819
        %823 = vset.pattern.permute.xlu0 0
        %824 = vperm.xlu0 %823, %v550
        %v825 = vpop.permute.xlu0 %824
        %828 = vset.pattern.permute.xlu0 0
        %829 = vperm.xlu0 %828, %v551
        %v830 = vpop.permute.xlu0 %829
        %833 = vset.pattern.permute.xlu0 0
        %834 = vperm.xlu0 %833, %v552
        %v835 = vpop.permute.xlu0 %834
        %838 = vset.pattern.permute.xlu0 0
        %839 = vperm.xlu0 %838, %v553
        %v840 = vpop.permute.xlu0 %839
        %843 = vset.pattern.permute.xlu0 0
        %844 = vperm.xlu0 %843, %v554
        %v845 = vpop.permute.xlu0 %844
        %v847 = vsub.f32 %v440, %v810
        %v848 = vsub.f32 %v445, %v815
        %v849 = vsub.f32 %v450, %v820
        %v850 = vsub.f32 %v455, %v825
        %v851 = vsub.f32 %v460, %v830
        %v852 = vsub.f32 %v465, %v835
        %v853 = vsub.f32 %v470, %v840
        %v854 = vsub.f32 %v475, %v845
        %v855 = vmul.f32 %v847, 1.442695
        %v856 = vpow.pop %v855
        %v857 = vmul.f32 %v848, 1.442695
        %v858 = vpow.pop %v857
        %v859 = vmul.f32 %v849, 1.442695
        %v860 = vpow.pop %v859
        %v861 = vmul.f32 %v850, 1.442695
        %v862 = vpow.pop %v861
        %v863 = vmul.f32 %v851, 1.442695
        %v864 = vpow.pop %v863
        %v865 = vmul.f32 %v852, 1.442695
        %v866 = vpow.pop %v865
        %v867 = vmul.f32 %v853, 1.442695
        %v868 = vpow.pop %v867
        %v869 = vmul.f32 %v854, 1.442695
        %v870 = vpow.pop %v869
        %v871 = vld [vmem:[#allocation3] sm:$0xff]
        %v872 = vld [vmem:[#allocation3 + $0x8] sm:$0xff]
        %v873 = vld [vmem:[#allocation3 + $0x10] sm:$0xff]
        %v874 = vld [vmem:[#allocation3 + $0x18] sm:$0xff]
        %v875 = vld [vmem:[#allocation3 + $0x20] sm:$0xff]
        %v876 = vld [vmem:[#allocation3 + $0x28] sm:$0xff]
        %v877 = vld [vmem:[#allocation3 + $0x30] sm:$0xff]
        %v878 = vld [vmem:[#allocation3 + $0x38] sm:$0xff]
        %v879 = vmul.f32 %v564, %v871
        %v880 = vmul.f32 %v566, %v872
        %v881 = vmul.f32 %v568, %v873
        %v882 = vmul.f32 %v570, %v874
        %v883 = vmul.f32 %v572, %v875
        %v884 = vmul.f32 %v574, %v876
        %v885 = vmul.f32 %v576, %v877
        %v886 = vmul.f32 %v578, %v878
        %887 = vadd.xlane.f32.xlu0 %v856
        %v888 = vpop.xlane.xlu0 %887
        %889 = vadd.xlane.f32.xlu0 %v858
        %v890 = vpop.xlane.xlu0 %889
        %891 = vadd.xlane.f32.xlu0 %v860
        %v892 = vpop.xlane.xlu0 %891
        %893 = vadd.xlane.f32.xlu0 %v862
        %v894 = vpop.xlane.xlu0 %893
        %895 = vadd.xlane.f32.xlu0 %v864
        %v896 = vpop.xlane.xlu0 %895
        %897 = vadd.xlane.f32.xlu0 %v866
        %v898 = vpop.xlane.xlu0 %897
        %899 = vadd.xlane.f32.xlu0 %v868
        %v900 = vpop.xlane.xlu0 %899
        %901 = vadd.xlane.f32.xlu0 %v870
        %v902 = vpop.xlane.xlu0 %901
        %v903 = vadd.f32 %v879, %v888
        %v904 = vadd.f32 %v880, %v890
        %v905 = vadd.f32 %v881, %v892
        %v906 = vadd.f32 %v882, %v894
        %v907 = vadd.f32 %v883, %v896
        %v908 = vadd.f32 %v884, %v898
        %v909 = vadd.f32 %v885, %v900
        %v910 = vadd.f32 %v886, %v902
        %911 = vst.msk [vmem:[#allocation3] sm:$0xff] %vm579, %v903
        %912 = vst.msk [vmem:[#allocation3 + $0x8] sm:$0xff] %vm579, %v904
        %913 = vst.msk [vmem:[#allocation3 + $0x10] sm:$0xff] %vm579, %v905
        %914 = vst.msk [vmem:[#allocation3 + $0x18] sm:$0xff] %vm579, %v906
        %915 = vst.msk [vmem:[#allocation3 + $0x20] sm:$0xff] %vm579, %v907
        %916 = vst.msk [vmem:[#allocation3 + $0x28] sm:$0xff] %vm579, %v908
        %917 = vst.msk [vmem:[#allocation3 + $0x30] sm:$0xff] %vm579, %v909
        %918 = vst.msk [vmem:[#allocation3 + $0x38] sm:$0xff] %vm579, %v910
        %v919 = vld [vmem:[#allocation4] sm:$0xff]
        %v920 = vld [vmem:[#allocation4 + $0x8] sm:$0xff]
        %v921 = vld [vmem:[#allocation4 + $0x10] sm:$0xff]
        %v922 = vld [vmem:[#allocation4 + $0x18] sm:$0xff]
        %v923 = vld [vmem:[#allocation4 + $0x20] sm:$0xff]
        %v924 = vld [vmem:[#allocation4 + $0x28] sm:$0xff]
        %v925 = vld [vmem:[#allocation4 + $0x30] sm:$0xff]
        %v926 = vld [vmem:[#allocation4 + $0x38] sm:$0xff]
        %v927 = vsel %vm515, %v440, 0.0
        %v928 = vsel %vm516, %v445, 0.0
        %v929 = vsel %vm517, %v450, 0.0
        %v930 = vsel %vm518, %v455, 0.0
        %v931 = vsel %vm519, %v460, 0.0
        %v932 = vsel %vm520, %v465, 0.0
        %v933 = vsel %vm521, %v470, 0.0
        %v934 = vsel %vm522, %v475, 0.0
        %935 = vadd.xlane.f32.xlu0 %v927
        %v936 = vpop.xlane.xlu0 %935
        %937 = vadd.xlane.f32.xlu0 %v928
        %v938 = vpop.xlane.xlu0 %937
        %939 = vadd.xlane.f32.xlu0 %v929
        %v940 = vpop.xlane.xlu0 %939
        %941 = vadd.xlane.f32.xlu0 %v930
        %v942 = vpop.xlane.xlu0 %941
        %943 = vadd.xlane.f32.xlu0 %v931
        %v944 = vpop.xlane.xlu0 %943
        %945 = vadd.xlane.f32.xlu0 %v932
        %v946 = vpop.xlane.xlu0 %945
        %947 = vadd.xlane.f32.xlu0 %v933
        %v948 = vpop.xlane.xlu0 %947
        %949 = vadd.xlane.f32.xlu0 %v934
        %v950 = vpop.xlane.xlu0 %949
        %v951 = vadd.f32 %v919, %v936
        %v952 = vadd.f32 %v920, %v938
        %v953 = vadd.f32 %v921, %v940
        %v954 = vadd.f32 %v922, %v942
        %v955 = vadd.f32 %v923, %v944
        %v956 = vadd.f32 %v924, %v946
        %v957 = vadd.f32 %v925, %v948
        %v958 = vadd.f32 %v926, %v950
        %959 = vst.msk [vmem:[#allocation4] sm:$0xff] %vm579, %v951
        %960 = vst.msk [vmem:[#allocation4 + $0x8] sm:$0xff] %vm579, %v952
        %961 = vst.msk [vmem:[#allocation4 + $0x10] sm:$0xff] %vm579, %v953
        %962 = vst.msk [vmem:[#allocation4 + $0x18] sm:$0xff] %vm579, %v954
        %963 = vst.msk [vmem:[#allocation4 + $0x20] sm:$0xff] %vm579, %v955
        %964 = vst.msk [vmem:[#allocation4 + $0x28] sm:$0xff] %vm579, %v956
        %965 = vst.msk [vmem:[#allocation4 + $0x30] sm:$0xff] %vm579, %v957
        %966 = vst.msk [vmem:[#allocation4 + $0x38] sm:$0xff] %vm579, %v958
      $region52: #{tpu_custom_call.1} parent=39 // pred_fallthru
        _
      %p967 = scmp.eq.s32.totalorder %s21, 1
      // Predicated region
      $region53: #{tpu_custom_call.1} parent=39 // pred_check
        %p968 = pneg %p967
      $region54: #{tpu_custom_call.1} parent=39 // pred_check_branch
        %970 = sbr.rel (%p968) target = $region56
      $region55: #{tpu_custom_call.1} parent=39 // pred_region
        %v971 = vld [vmem:[%s312] sm:$0xff]
        %v972 = vld [vmem:[%s312 + $0x8] sm:$0xff]
        %v973 = vld [vmem:[%s312 + $0x10] sm:$0xff]
        %v974 = vld [vmem:[%s312 + $0x18] sm:$0xff]
        %v975 = vld [vmem:[%s312 + $0x20] sm:$0xff]
        %v976 = vld [vmem:[%s312 + $0x28] sm:$0xff]
        %v977 = vld [vmem:[%s312 + $0x30] sm:$0xff]
        %v978 = vld [vmem:[%s312 + $0x38] sm:$0xff]
        %v979 = vsub.f32 %v971, 1.0
        %v980 = vsub.f32 %v972, 1.0
        %v981 = vsub.f32 %v973, 1.0
        %v982 = vsub.f32 %v974, 1.0
        %v983 = vsub.f32 %v975, 1.0
        %v984 = vsub.f32 %v976, 1.0
        %v985 = vsub.f32 %v977, 1.0
        %v986 = vsub.f32 %v978, 1.0
        %v987 = vld [vmem:[#allocation2] sm:$0xff]
        %v988 = vld [vmem:[#allocation2 + $0x8] sm:$0xff]
        %v989 = vld [vmem:[#allocation2 + $0x10] sm:$0xff]
        %v990 = vld [vmem:[#allocation2 + $0x18] sm:$0xff]
        %v991 = vld [vmem:[#allocation2 + $0x20] sm:$0xff]
        %v992 = vld [vmem:[#allocation2 + $0x28] sm:$0xff]
        %v993 = vld [vmem:[#allocation2 + $0x30] sm:$0xff]
        %v994 = vld [vmem:[#allocation2 + $0x38] sm:$0xff]
        %v995 = vld [vmem:[#allocation3] sm:$0xff]
        %v996 = vld [vmem:[#allocation3 + $0x8] sm:$0xff]
        %v997 = vld [vmem:[#allocation3 + $0x10] sm:$0xff]
        %v998 = vld [vmem:[#allocation3 + $0x18] sm:$0xff]
        %v999 = vld [vmem:[#allocation3 + $0x20] sm:$0xff]
        %v1000 = vld [vmem:[#allocation3 + $0x28] sm:$0xff]
        %v1001 = vld [vmem:[#allocation3 + $0x30] sm:$0xff]
        %v1002 = vld [vmem:[#allocation3 + $0x38] sm:$0xff]
        %v1003 = vlog2.pop %v995
        %v1004 = vmul.f32 %v1003, 0.6931472
        %v1005 = vlog2.pop %v996
        %v1006 = vmul.f32 %v1005, 0.6931472
        %v1007 = vlog2.pop %v997
        %v1008 = vmul.f32 %v1007, 0.6931472
        %v1009 = vlog2.pop %v998
        %v1010 = vmul.f32 %v1009, 0.6931472
        %v1011 = vlog2.pop %v999
        %v1012 = vmul.f32 %v1011, 0.6931472
        %v1013 = vlog2.pop %v1000
        %v1014 = vmul.f32 %v1013, 0.6931472
        %v1015 = vlog2.pop %v1001
        %v1016 = vmul.f32 %v1015, 0.6931472
        %v1017 = vlog2.pop %v1002
        %v1018 = vmul.f32 %v1017, 0.6931472
        %v1019 = vadd.f32 %v987, %v1004
        %v1020 = vadd.f32 %v988, %v1006
        %v1021 = vadd.f32 %v989, %v1008
        %v1022 = vadd.f32 %v990, %v1010
        %v1023 = vadd.f32 %v991, %v1012
        %v1024 = vadd.f32 %v992, %v1014
        %v1025 = vadd.f32 %v993, %v1016
        %v1026 = vadd.f32 %v994, %v1018
        %v1027 = vld [vmem:[#allocation4] sm:$0xff]
        %v1028 = vld [vmem:[#allocation4 + $0x8] sm:$0xff]
        %v1029 = vld [vmem:[#allocation4 + $0x10] sm:$0xff]
        %v1030 = vld [vmem:[#allocation4 + $0x18] sm:$0xff]
        %v1031 = vld [vmem:[#allocation4 + $0x20] sm:$0xff]
        %v1032 = vld [vmem:[#allocation4 + $0x28] sm:$0xff]
        %v1033 = vld [vmem:[#allocation4 + $0x30] sm:$0xff]
        %v1034 = vld [vmem:[#allocation4 + $0x38] sm:$0xff]
        %v1035 = vmul.f32 %v1019, %v979
        %v1036 = vmul.f32 %v1020, %v980
        %v1037 = vmul.f32 %v1021, %v981
        %v1038 = vmul.f32 %v1022, %v982
        %v1039 = vmul.f32 %v1023, %v983
        %v1040 = vmul.f32 %v1024, %v984
        %v1041 = vmul.f32 %v1025, %v985
        %v1042 = vmul.f32 %v1026, %v986
        %v1043 = vsub.f32 %v1027, %v1035
        %v1044 = vsub.f32 %v1028, %v1036
        %v1045 = vsub.f32 %v1029, %v1037
        %v1046 = vsub.f32 %v1030, %v1038
        %v1047 = vsub.f32 %v1031, %v1039
        %v1048 = vsub.f32 %v1032, %v1040
        %v1049 = vsub.f32 %v1033, %v1041
        %v1050 = vsub.f32 %v1034, %v1042
        %v1051 = vrcp.pop %v971
        %v1052 = vmul.f32 %v1043, %v1051
        %v1053 = vrcp.pop %v972
        %v1054 = vmul.f32 %v1044, %v1053
        %v1055 = vrcp.pop %v973
        %v1056 = vmul.f32 %v1045, %v1055
        %v1057 = vrcp.pop %v974
        %v1058 = vmul.f32 %v1046, %v1057
        %v1059 = vrcp.pop %v975
        %v1060 = vmul.f32 %v1047, %v1059
        %v1061 = vrcp.pop %v976
        %v1062 = vmul.f32 %v1048, %v1061
        %v1063 = vrcp.pop %v977
        %v1064 = vmul.f32 %v1049, %v1063
        %v1065 = vrcp.pop %v978
        %v1066 = vmul.f32 %v1050, %v1065
        %1067 = vst.msk [vmem:[%s318] sm:$0xff] %vm579, %v1052
        %1068 = vst.msk [vmem:[%s318 + $0x8] sm:$0xff] %vm579, %v1054
        %1069 = vst.msk [vmem:[%s318 + $0x10] sm:$0xff] %vm579, %v1056
        %1070 = vst.msk [vmem:[%s318 + $0x18] sm:$0xff] %vm579, %v1058
        %1071 = vst.msk [vmem:[%s318 + $0x20] sm:$0xff] %vm579, %v1060
        %1072 = vst.msk [vmem:[%s318 + $0x28] sm:$0xff] %vm579, %v1062
        %1073 = vst.msk [vmem:[%s318 + $0x30] sm:$0xff] %vm579, %v1064
        %1074 = vst.msk [vmem:[%s318 + $0x38] sm:$0xff] %vm579, %v1066
      $region56: #{tpu_custom_call.1} parent=39 // pred_fallthru
        _
      %s1075 = smul.u32 8, %s20
      %p1076 = scmp.lt.s32.totalorder %s1075, 31
      %s1077 = scalar_select %p1076, %s1075, 31
      %s1078 = smul.addr %s1077, 8
      %s1079 = scalar_lea.vmem %s5, %s1078
      // Predicated region
      $region57: #{tpu_custom_call.1} parent=39 // pred_check
        %p1080 = pneg %p176
      $region58: #{tpu_custom_call.1} parent=39 // pred_check_branch
        %1082 = sbr.rel (%p1080) target = $region60
      $region59: #{tpu_custom_call.1} parent=39 // pred_region
        %s1083 = smul.u32 8, %s20
      $region60: #{tpu_custom_call.1} parent=39 // pred_fallthru
        _
    $region40: #{tpu_custom_call.1} parent=5 // pred_fallthru
      _
    %p1084 = scmp.le.s32.totalorder 2, %s11
    // Predicated region
    $region61: #{tpu_custom_call.1} parent=5 // pred_check
      %p1085 = pneg %p1084
    $region62: #{tpu_custom_call.1} parent=5 // pred_check_branch
      %1087 = sbr.rel (%p1085) target = $region64
    $region63: #{tpu_custom_call.1} parent=5 // pred_region
      %s1088 = ssub.s32 %s11, 2
      // Predicated region
      $region65: #{tpu_custom_call.1} parent=63 // pred_check
        %p1089 = pneg %p182
      $region66: #{tpu_custom_call.1} parent=63 // pred_check_branch
        %1091 = sbr.rel (%p1089) target = $region68
      $region67: #{tpu_custom_call.1} parent=63 // pred_region
        %s1092 = smul.u32 8, %s22
        %p1093 = scmp.lt.s32.totalorder %s1092, 31
        %s1094 = scalar_select %p1093, %s1092, 31
        %s1095 = smul.addr %s1094, 8
        %s1096 = scalar_lea.vmem %s5, %s1095
      $region68: #{tpu_custom_call.1} parent=63 // pred_fallthru
        _
    $region64: #{tpu_custom_call.1} parent=5 // pred_fallthru
      _
  $region6: #{tpu_custom_call.1} parent=0 // loop_footer
    %s15 = sadd.s32 1, %s11
  $region7: #{tpu_custom_call.1} parent=0 // loop_footer_branch
    %10 = sbr.rel target = $region3
  $region8: #{tpu_custom_call.1} parent=0 // loop_exit
    _

</llo_original>
